<compile_context>
chip_gen: v6e
topology: v6e:2x2x1
jax: 0.10.0
libtpu: 0.0.40
codegen_flags: <defaults>
</compile_context>

<pallas_src>
import functools

import jax
import jax.numpy as jnp
from jax.experimental import pallas as pl
from jax.experimental.pallas import tpu as pltpu


_COEFS = {0: (0.4811, 0.5189),
          1: (0.4092, 0.5908),
          2: (0.5121, 0.4879)}


def _round_up(v, m):
    return ((v + m - 1) // m) * m


def _graphsage_kernel(coef2, coef3, e,
                      x_ref, w_ref, wl_ref, bl_ref,
                      res_ref, pred_ref):
    # x: (TN, F) node-feature tile, w: (F, 3E) fused pre-transposed encoder
    # weights (pinned across the grid), wl: (1, E) logistic row, bl: (1,) SMEM.
    x = x_ref[...]
    w = w_ref[...]

    # Single fused MXU matmul for all three encoders, fp32 accumulation.
    y = jnp.dot(x, w, preferred_element_type=jnp.float32)        # (TN, 3E)
    y = jnp.maximum(y, 0.0)                                       # ReLU

    # result.t() = e1 + c2*e2 + c3*e3 ; E=128 keeps slices on lane boundaries.
    res_t = y[:, :e] + coef2 * y[:, e:2 * e] + coef3 * y[:, 2 * e:3 * e]
    res_ref[...] = res_t.astype(res_ref.dtype)

    # Logistic head: output width 1, so do VPU multiply + lane reduction
    # instead of an MXU matmul (keeps the MXU for the encoder matmul).
    logits = jnp.sum(res_t * wl_ref[...], axis=-1, keepdims=True) + bl_ref[0]
    pred_ref[...] = jax.nn.sigmoid(logits).astype(pred_ref.dtype)


def supervised_graphsage_forward(x, w1, w2, w3, w_log, b_log,
                                 predict_layer=0, *, block_n=512,
                                 matmul_dtype=jnp.float32):
    """Fused forward: returns (result.t(), predict) like the PyTorch module."""
    coef2, coef3 = _COEFS[predict_layer]

    n, f = x.shape
    e = w1.shape[0]

    # One-time layout plumbing (hoisted out of the kernel): transpose each
    # (E, F) weight to (F, E) and concatenate to (F, 3E).
    w_cat = jnp.concatenate([w1.T, w2.T, w3.T], axis=1).astype(matmul_dtype)
    x_c = x.astype(matmul_dtype)
    wl_row = jnp.reshape(w_log, (1, e)).astype(jnp.float32)   # head stays fp32
    b_smem = jnp.reshape(b_log, (1,)).astype(jnp.float32)

    # Tile over nodes; pad N up to a tile multiple so blocks are
    # (8,128)-aligned and the tail tile needs no masking.
    tn = min(block_n, _round_up(n, 8))
    n_pad = _round_up(n, tn)
    if n_pad != n:
        x_c = jnp.pad(x_c, ((0, n_pad - n), (0, 0)))
    grid = (n_pad // tn,)

    kernel = functools.partial(_graphsage_kernel, coef2, coef3, e)

    res_t, predict = pl.pallas_call(
        kernel,
        out_shape=(jax.ShapeDtypeStruct((n_pad, e), jnp.float32),
                   jax.ShapeDtypeStruct((n_pad, 1), jnp.float32)),
        grid=grid,
        in_specs=[
            pl.BlockSpec((tn, f), lambda i: (i, 0)),        # x row-tile
            pl.BlockSpec((f, 3 * e), lambda i: (0, 0)),     # fused weights (pinned)
            pl.BlockSpec((1, e), lambda i: (0, 0)),         # logistic weight row
            pl.BlockSpec(memory_space=pltpu.SMEM),          # logistic bias scalar
        ],
        out_specs=(pl.BlockSpec((tn, e), lambda i: (i, 0)),
                   pl.BlockSpec((tn, 1), lambda i: (i, 0))),
        compiler_params=pltpu.CompilerParams(
            dimension_semantics=("parallel",)),
    )(x_c, w_cat, wl_row, b_smem)

    # Strip the node padding.
    return res_t[:n], predict[:n]


def _reference_forward(x, w1, w2, w3, w_log, b_log, predict_layer=0):
    c2, c3 = _COEFS[predict_layer]
    e1 = jnp.maximum(w1 @ x.T, 0.0)
    e2 = jnp.maximum(w2 @ x.T, 0.0)
    e3 = jnp.maximum(w3 @ x.T, 0.0)
    result = e1 + c2 * e2 + c3 * e3                          # (E, N)
    predict = jax.nn.sigmoid(result.T @ w_log + b_log)       # (N, 1)
    return result.T, predict


if __name__ == "__main__":
    # Small deterministic shapes consistent with the module:
    #   N nodes, F raw features, embed_dim E.  N is deliberately NOT a
    #   multiple of the tile so the padding path is exercised.
    N, F, E = 200, 64, 128
    predict_layer = 0

    key = jax.random.PRNGKey(0)
    kx, k1, k2, k3, kl, kb = jax.random.split(key, 6)

    x = jax.random.normal(kx, (N, F), dtype=jnp.float32)
    w1 = jax.random.normal(k1, (E, F), dtype=jnp.float32) * 0.1
    w2 = jax.random.normal(k2, (E, F), dtype=jnp.float32) * 0.1
    w3 = jax.random.normal(k3, (E, F), dtype=jnp.float32) * 0.1
    w_log = jax.random.normal(kl, (E, 1), dtype=jnp.float32) * 0.1
    b_log = jax.random.normal(kb, (), dtype=jnp.float32) * 0.1

    ref_res_t, ref_pred = _reference_forward(
        x, w1, w2, w3, w_log, b_log, predict_layer=predict_layer)

    # fp32-operand path (exact): block_n=128 -> 2-step grid + tail padding.
    res_t, predict = supervised_graphsage_forward(
        x, w1, w2, w3, w_log, b_log, predict_layer=predict_layer,
        block_n=128, matmul_dtype=jnp.float32)
    jax.block_until_ready((res_t, predict))
    assert res_t.shape == (N, E) and predict.shape == (N, 1)
    assert jnp.allclose(res_t, ref_res_t, atol=1e-4, rtol=1e-4)
    assert jnp.allclose(predict, ref_pred, atol=1e-5, rtol=1e-5)

    # bf16-operand path (fp32 accumulate) for v6e/v7x MXU throughput;
    # tolerances loosened for the reduced operand precision.
    res_bf, pred_bf = supervised_graphsage_forward(
        x, w1, w2, w3, w_log, b_log, predict_layer=predict_layer,
        block_n=128, matmul_dtype=jnp.bfloat16)
    jax.block_until_ready((res_bf, pred_bf))
    assert jnp.allclose(res_bf, ref_res_t, atol=5e-2, rtol=5e-2)
    assert jnp.allclose(pred_bf, ref_pred, atol=2e-2, rtol=2e-2)

    print("KERNEL_OK")
</pallas_src>

<mosaic_0001>
module attributes {stable_mosaic.version = 11 : i64} {
  func.func @_graphsage_kernel(%arg0: i32, %arg1: memref<128x64xf32, #tpu.memory_space<vmem>>, %arg2: memref<64x384xf32, #tpu.memory_space<vmem>>, %arg3: memref<1x128xf32, #tpu.memory_space<vmem>>, %arg4: memref<1xf32, #tpu.memory_space<smem>>, %arg5: memref<128x128xf32, #tpu.memory_space<vmem>>, %arg6: memref<128x1xf32, #tpu.memory_space<vmem>>) attributes {dimension_semantics = [#tpu.dimension_semantics<parallel>], iteration_bounds = array<i64: 2>, scalar_prefetch = 0 : i64, scratch_operands = 0 : i64, tpu.core_type = #tpu.core_type<tc>, window_params = [{transform_indices = @transform_0, window_bounds = array<i64: 128, 64>}, {pipeline_mode = #tpu.pipeline_mode<synchronous>, transform_indices = @transform_1, window_bounds = array<i64: 64, 384>}, {pipeline_mode = #tpu.pipeline_mode<synchronous>, transform_indices = @transform_2, window_bounds = array<i64: 1, 128>}, {transform_indices = @transform_3, window_bounds = array<i64: 1>}, {transform_indices = @transform_4, window_bounds = array<i64: 128, 128>}, {transform_indices = @transform_5, window_bounds = array<i64: 128, 1>}]} {
    %c0 = arith.constant 0 : index
    %c0_0 = arith.constant 0 : index
    %0 = vector.load %arg1[%c0, %c0_0] : memref<128x64xf32, #tpu.memory_space<vmem>>, vector<128x64xf32>
    %c0_1 = arith.constant 0 : index
    %c0_2 = arith.constant 0 : index
    %1 = vector.load %arg2[%c0_1, %c0_2] : memref<64x384xf32, #tpu.memory_space<vmem>>, vector<64x384xf32>
    %cst = arith.constant dense<0.000000e+00> : vector<128x384xf32>
    %2 = tpu.matmul %0, %1, %cst {dimension_numbers = #tpu.dot_dimension_numbers<[1], [0], [0], [1], [0, 0, 1, 1], [], []>} : vector<128x64xf32>, vector<64x384xf32>, vector<128x384xf32> -> vector<128x384xf32>
    %cst_3 = arith.constant 0.000000e+00 : f32
    %3 = vector.broadcast %cst_3 : f32 to vector<128x384xf32>
    %4 = arith.maximumf %2, %3 : vector<128x384xf32>
    %5 = vector.extract_strided_slice %4 {offsets = [0, 0], sizes = [128, 128], strides = [1, 1]} : vector<128x384xf32> to vector<128x128xf32>
    %6 = vector.extract_strided_slice %4 {offsets = [0, 128], sizes = [128, 128], strides = [1, 1]} : vector<128x384xf32> to vector<128x128xf32>
    %cst_4 = arith.constant 4.811000e-01 : f32
    %7 = vector.broadcast %cst_4 : f32 to vector<128x128xf32>
    %8 = arith.mulf %7, %6 : vector<128x128xf32>
    %9 = arith.addf %5, %8 : vector<128x128xf32>
    %10 = vector.extract_strided_slice %4 {offsets = [0, 256], sizes = [128, 128], strides = [1, 1]} : vector<128x384xf32> to vector<128x128xf32>
    %cst_5 = arith.constant 5.189000e-01 : f32
    %11 = vector.broadcast %cst_5 : f32 to vector<128x128xf32>
    %12 = arith.mulf %11, %10 : vector<128x128xf32>
    %13 = arith.addf %9, %12 : vector<128x128xf32>
    %c0_6 = arith.constant 0 : index
    %c0_7 = arith.constant 0 : index
    %14 = vector.load %arg5[%c0_6, %c0_7] : memref<128x128xf32, #tpu.memory_space<vmem>>, vector<128x128xf32>
    tpu.vector_store %arg5[%c0_6, %c0_7], %13 {strides = array<i32>} : memref<128x128xf32, #tpu.memory_space<vmem>>, vector<128x128xf32>,
    %c0_8 = arith.constant 0 : index
    %c0_9 = arith.constant 0 : index
    %15 = vector.load %arg3[%c0_8, %c0_9] : memref<1x128xf32, #tpu.memory_space<vmem>>, vector<1x128xf32>
    %16 = vector.broadcast %15 : vector<1x128xf32> to vector<128x128xf32>
    %17 = arith.mulf %13, %16 : vector<128x128xf32>
    %cst_10 = arith.constant dense<0.000000e+00> : vector<128xf32>
    %18 = vector.multi_reduction <add>, %17, %cst_10 [1] : vector<128x128xf32> to vector<128xf32>
    %19 = vector.shape_cast %18 : vector<128xf32> to vector<128x1xf32>
    %c0_11 = arith.constant 0 : index
    %20 = memref.load %arg4[%c0_11] : memref<1xf32, #tpu.memory_space<smem>>
    %21 = vector.broadcast %20 : f32 to vector<128x1xf32>
    %22 = arith.addf %19, %21 : vector<128x1xf32>
    %23 = arith.negf %22 : vector<128x1xf32>
    %24 = math.exp %23 : vector<128x1xf32>
    %cst_12 = arith.constant 1.000000e+00 : f32
    %25 = vector.broadcast %cst_12 : f32 to vector<128x1xf32>
    %26 = arith.addf %25, %24 : vector<128x1xf32>
    %27 = arith.divf %25, %26 : vector<128x1xf32>
    %c0_13 = arith.constant 0 : index
    %c0_14 = arith.constant 0 : index
    %28 = vector.load %arg6[%c0_13, %c0_14] : memref<128x1xf32, #tpu.memory_space<vmem>>, vector<128x1xf32>
    tpu.vector_store %arg6[%c0_13, %c0_14], %27 {strides = array<i32>} : memref<128x1xf32, #tpu.memory_space<vmem>>, vector<128x1xf32>,
    return
  }
  func.func @transform_0(%arg0: i32) -> (i32, i32) {
    %c0_i32 = arith.constant 0 : i32
    %c0_i32_0 = arith.constant 0 : i32
    return %arg0, %c0_i32 : i32, i32
  }
  func.func @transform_1(%arg0: i32) -> (i32, i32) {
    %c0_i32 = arith.constant 0 : i32
    %c0_i32_0 = arith.constant 0 : i32
    %c0_i32_1 = arith.constant 0 : i32
    return %c0_i32, %c0_i32_0 : i32, i32
  }
  func.func @transform_2(%arg0: i32) -> (i32, i32) {
    %c0_i32 = arith.constant 0 : i32
    %c0_i32_0 = arith.constant 0 : i32
    %c0_i32_1 = arith.constant 0 : i32
    return %c0_i32, %c0_i32_0 : i32, i32
  }
  func.func @transform_3(%arg0: i32) -> i32 {
    %c0_i32 = arith.constant 0 : i32
    %c0_i32_0 = arith.constant 0 : i32
    return %c0_i32 : i32
  }
  func.func @transform_4(%arg0: i32) -> (i32, i32) {
    %c0_i32 = arith.constant 0 : i32
    %c0_i32_0 = arith.constant 0 : i32
    return %arg0, %c0_i32 : i32, i32
  }
  func.func @transform_5(%arg0: i32) -> (i32, i32) {
    %c0_i32 = arith.constant 0 : i32
    %c0_i32_0 = arith.constant 0 : i32
    return %arg0, %c0_i32 : i32, i32
  }
}

</mosaic_0001>

<llo_original>
// kernel: tpu_custom_call.1
$region0: #{tpu_custom_call.1}
  #allocation0 [shape = 'u32[]', space=smem, size = 0x4, offset = 0x4, fixed_abs, tag = 'smem constant byte address 0x4 - core index']
  #allocation1 [shape = 'u32[144,128]{1,0:T(1,128)}', space=vmem, size = 0x12000, scoped, tag = 'internal scratch']
  #allocation2 [shape = 'f32[1]{0:T(128)S(6)}', space=smem, size = 0x200, scoped, tag = 'scoped memory for tpu_custom_call.1']
  %s0 = inlined_call_operand.vmem [shape: f32[256,64], index: 0, kind: input, shape index: {}]
  %s1 = inlined_call_operand.vmem [shape: f32[64,384], index: 1, kind: input, shape index: {}]
  %s2 = inlined_call_operand.vmem [shape: f32[1,128], index: 2, kind: input, shape index: {}]
  %s3 = inlined_call_operand.<no memory space> [shape: f32[1], index: 3, kind: input, shape index: {}]
  %s4 = inlined_call_operand.hbm [shape: f32[256,128], index: 4, kind: output, shape index: {0}]
  %s5 = inlined_call_operand.vmem [shape: f32[256,1], index: 5, kind: output, shape index: {1}]
  %6 = xla_tuple %s4, %s5
  %s7 = sld [smem:[#allocation0]]
  $region57: #{tpu_custom_call.1} parent=0
    _
  %s9 = ssub.s32 1, %s7
  %s10 = scalar_select 0, %s9, %s7
  %11 = sst [smem:[#allocation2]] %s3
  $region1: #{tpu_custom_call.1} parent=0
    #allocation3 [shape = 'u8[131072]{0}', space=vmem, size = 0x20000, scoped, tag = 'output window, operand 0']
    #allocation4 [shape = 's32[2]{0}', space=sflag, size = 0x8, scoped, tag = 'scoped memory for tpu_custom_call.1']
    %12 = vsyncpa [#allocation4], 0
    %s13 = scalar_lea.sflag [#allocation4], 1
    %14 = vsyncpa %s13, 0
    loop: start=0, step=1, limit=4
    $region2: #{tpu_custom_call.1} parent=1 // loop_pre_header
      _
    $region3: #{tpu_custom_call.1} parent=1 // loop_header
      %s16 = sphi 0, %s20
      %p17 = scmp.ge.s32.totalorder %s16, 4
      %s26 = sphi 0, %s28
      %s29 = sphi 0, %s26
      %s30 = sphi 0, %s29
      %s46 = sphi 0, %s30
      %s50 = sphi 0, %s50
      %s52 = sphi 0, %s50
      %s53 = sphi 0, %s52
      %s67 = sphi 0, %s53
      %s71 = sphi 0, %s71
      %s73 = sphi 0, %s71
      %s74 = sphi 0, %s73
      %s88 = sphi 0, %s74
      %s92 = sphi 0, %s92
      %s94 = sphi 0, %s92
      %s95 = sphi 0, %s94
      %s109 = sphi 0, %s95
      %s115 = sphi 0, %s117
      %s118 = sphi 0, %s115
      %s119 = sphi 0, %s118
      %s135 = sphi 0, %s119
      %s141 = sphi 0, %s143
      %s144 = sphi 0, %s141
      %s145 = sphi 0, %s144
      %s161 = sphi 0, %s145
    $region4: #{tpu_custom_call.1} parent=1 // loop_header_branch
      %19 = sbr.rel (%p17) target = $region8
    $region5: #{tpu_custom_call.1} parent=1 // loop_body
      %s21 = ssub.s32 %s16, 1
      %s22 = ssub.s32 %s16, 2
      %s23 = sadd.s32 %s16, 1
      %s24 = ssub.s32 %s16, %s23
      %p25 = scmp.eq.s32.totalorder %s24, 0
      %s27 = sadd.s32 %s26, 1
      %s28 = scalar_select %p25, %s26, %s27
      %p31 = pneg %p25
      %p32 = scmp.eq.s32.totalorder %s16, 1
      %p33 = por %p31, %p32
      %p34 = scmp.ne.s32.totalorder %s26, %s29
      %p35 = scmp.eq.s32.totalorder %s16, 0
      %p36 = por %p34, %p35
      %p37 = scmp.ne.s32.totalorder %s26, %s29
      %p38 = scmp.eq.s32.totalorder %s21, 1
      %p39 = por %p37, %p38
      %p40 = scmp.ne.s32.totalorder %s29, %s30
      %p41 = scmp.eq.s32.totalorder %s21, 0
      %p42 = por %p40, %p41
      %p43 = scmp.ne.s32.totalorder %s29, %s30
      %p44 = scmp.eq.s32.totalorder %s22, 1
      %p45 = por %p43, %p44
      %p47 = scmp.ne.s32.totalorder %s30, %s46
      %p48 = scmp.eq.s32.totalorder %s22, 0
      %p49 = por %p47, %p48
      %s51 = sadd.s32 %s50, 1
      %p54 = scmp.eq.s32.totalorder %s16, 1
      %p55 = scmp.ne.s32.totalorder %s50, %s52
      %p56 = scmp.eq.s32.totalorder %s16, 0
      %p57 = por %p55, %p56
      %p58 = scmp.ne.s32.totalorder %s50, %s52
      %p59 = scmp.eq.s32.totalorder %s21, 1
      %p60 = por %p58, %p59
      %p61 = scmp.ne.s32.totalorder %s52, %s53
      %p62 = scmp.eq.s32.totalorder %s21, 0
      %p63 = por %p61, %p62
      %p64 = scmp.ne.s32.totalorder %s52, %s53
      %p65 = scmp.eq.s32.totalorder %s22, 1
      %p66 = por %p64, %p65
      %p68 = scmp.ne.s32.totalorder %s53, %s67
      %p69 = scmp.eq.s32.totalorder %s22, 0
      %p70 = por %p68, %p69
      %s72 = sadd.s32 %s71, 1
      %p75 = scmp.eq.s32.totalorder %s16, 1
      %p76 = scmp.ne.s32.totalorder %s71, %s73
      %p77 = scmp.eq.s32.totalorder %s16, 0
      %p78 = por %p76, %p77
      %p79 = scmp.ne.s32.totalorder %s71, %s73
      %p80 = scmp.eq.s32.totalorder %s21, 1
      %p81 = por %p79, %p80
      %p82 = scmp.ne.s32.totalorder %s73, %s74
      %p83 = scmp.eq.s32.totalorder %s21, 0
      %p84 = por %p82, %p83
      %p85 = scmp.ne.s32.totalorder %s73, %s74
      %p86 = scmp.eq.s32.totalorder %s22, 1
      %p87 = por %p85, %p86
      %p89 = scmp.ne.s32.totalorder %s74, %s88
      %p90 = scmp.eq.s32.totalorder %s22, 0
      %p91 = por %p89, %p90
      %s93 = sadd.s32 %s92, 1
      %p96 = scmp.eq.s32.totalorder %s16, 1
      %p97 = scmp.ne.s32.totalorder %s92, %s94
      %p98 = scmp.eq.s32.totalorder %s16, 0
      %p99 = por %p97, %p98
      %p100 = scmp.ne.s32.totalorder %s92, %s94
      %p101 = scmp.eq.s32.totalorder %s21, 1
      %p102 = por %p100, %p101
      %p103 = scmp.ne.s32.totalorder %s94, %s95
      %p104 = scmp.eq.s32.totalorder %s21, 0
      %p105 = por %p103, %p104
      %p106 = scmp.ne.s32.totalorder %s94, %s95
      %p107 = scmp.eq.s32.totalorder %s22, 1
      %p108 = por %p106, %p107
      %p110 = scmp.ne.s32.totalorder %s95, %s109
      %p111 = scmp.eq.s32.totalorder %s22, 0
      %p112 = por %p110, %p111
      %s113 = ssub.s32 %s16, %s23
      %p114 = scmp.eq.s32.totalorder %s113, 0
      %s116 = sadd.s32 %s115, 1
      %s117 = scalar_select %p114, %s115, %s116
      %p120 = pneg %p114
      %p121 = scmp.eq.s32.totalorder %s16, 1
      %p122 = por %p120, %p121
      %p123 = scmp.ne.s32.totalorder %s115, %s118
      %p124 = scmp.eq.s32.totalorder %s16, 0
      %p125 = por %p123, %p124
      %p126 = scmp.ne.s32.totalorder %s115, %s118
      %p127 = scmp.eq.s32.totalorder %s21, 1
      %p128 = por %p126, %p127
      %p129 = scmp.ne.s32.totalorder %s118, %s119
      %p130 = scmp.eq.s32.totalorder %s21, 0
      %p131 = por %p129, %p130
      %p132 = scmp.ne.s32.totalorder %s118, %s119
      %p133 = scmp.eq.s32.totalorder %s22, 1
      %p134 = por %p132, %p133
      %p136 = scmp.ne.s32.totalorder %s119, %s135
      %p137 = scmp.eq.s32.totalorder %s22, 0
      %p138 = por %p136, %p137
      %s139 = ssub.s32 %s16, %s23
      %p140 = scmp.eq.s32.totalorder %s139, 0
      %s142 = sadd.s32 %s141, 1
      %s143 = scalar_select %p140, %s141, %s142
      %p146 = pneg %p140
      %p147 = scmp.eq.s32.totalorder %s16, 1
      %p148 = por %p146, %p147
      %p149 = scmp.ne.s32.totalorder %s141, %s144
      %p150 = scmp.eq.s32.totalorder %s16, 0
      %p151 = por %p149, %p150
      %p152 = scmp.ne.s32.totalorder %s141, %s144
      %p153 = scmp.eq.s32.totalorder %s21, 1
      %p154 = por %p152, %p153
      %p155 = scmp.ne.s32.totalorder %s144, %s145
      %p156 = scmp.eq.s32.totalorder %s21, 0
      %p157 = por %p155, %p156
      %p158 = scmp.ne.s32.totalorder %s144, %s145
      %p159 = scmp.eq.s32.totalorder %s22, 1
      %p160 = por %p158, %p159
      %p162 = scmp.ne.s32.totalorder %s145, %s161
      %p163 = scmp.eq.s32.totalorder %s22, 0
      %p164 = por %p162, %p163
      %p165 = scmp.le.s32.totalorder 1, %s16
      %p166 = scmp.lt.s32.totalorder %s16, 3
      %p167 = pnand %p165, %p166
      %p168 = pneg %p167
      // Predicated region
      $region9: #{tpu_custom_call.1} parent=5 // pred_check
        _
      $region10: #{tpu_custom_call.1} parent=5 // pred_check_branch
        %170 = sbr.rel (%p167) target = $region12
      $region11: #{tpu_custom_call.1} parent=5 // pred_region
        %s171 = ssub.s32 %s16, 1
        // Predicated region
        $region13: #{tpu_custom_call.1} parent=11 // pred_check
          %p172 = pneg %p63
        $region14: #{tpu_custom_call.1} parent=11 // pred_check_branch
          %174 = sbr.rel (%p172) target = $region16
        $region15: #{tpu_custom_call.1} parent=11 // pred_region
          _
        $region16: #{tpu_custom_call.1} parent=11 // pred_fallthru
          _
        // Predicated region
        $region17: #{tpu_custom_call.1} parent=11 // pred_check
          %p175 = pneg %p84
        $region18: #{tpu_custom_call.1} parent=11 // pred_check_branch
          %177 = sbr.rel (%p175) target = $region20
        $region19: #{tpu_custom_call.1} parent=11 // pred_region
          _
        $region20: #{tpu_custom_call.1} parent=11 // pred_fallthru
          _
        // Predicated region
        $region21: #{tpu_custom_call.1} parent=11 // pred_check
          %p178 = pneg %p105
        $region22: #{tpu_custom_call.1} parent=11 // pred_check_branch
          %180 = sbr.rel (%p178) target = $region24
        $region23: #{tpu_custom_call.1} parent=11 // pred_region
          _
        $region24: #{tpu_custom_call.1} parent=11 // pred_fallthru
          _
      $region12: #{tpu_custom_call.1} parent=5 // pred_fallthru
        _
      %p181 = scmp.lt.s32.totalorder %s16, 2
      // Predicated region
      $region25: #{tpu_custom_call.1} parent=5 // pred_check
        %p182 = pneg %p181
      $region26: #{tpu_custom_call.1} parent=5 // pred_check_branch
        %184 = sbr.rel (%p182) target = $region28
      $region27: #{tpu_custom_call.1} parent=5 // pred_region
        // Predicated region
        $region29: #{tpu_custom_call.1} parent=27 // pred_check
          %p185 = pneg %p36
        $region30: #{tpu_custom_call.1} parent=27 // pred_check_branch
          %187 = sbr.rel (%p185) target = $region32
        $region31: #{tpu_custom_call.1} parent=27 // pred_region
          %s188 = smul.u32 16, %s16
          %p189 = scmp.lt.s32.totalorder %s188, 31
          %s190 = scalar_select %p189, %s188, 31
          %s191 = smul.addr %s190, 8
          %s192 = scalar_lea.vmem %s0, %s191
          %s193 = smul.u32 16, %s16
        $region32: #{tpu_custom_call.1} parent=27 // pred_fallthru
          _
      $region28: #{tpu_custom_call.1} parent=5 // pred_fallthru
        _
      %p194 = scmp.le.s32.totalorder 1, %s16
      %p195 = scmp.lt.s32.totalorder %s16, 3
      %p196 = pnand %p194, %p195
      %p197 = pneg %p196
      // Predicated region
      $region33: #{tpu_custom_call.1} parent=5 // pred_check
        _
      $region34: #{tpu_custom_call.1} parent=5 // pred_check_branch
        %199 = sbr.rel (%p196) target = $region36
      $region35: #{tpu_custom_call.1} parent=5 // pred_region
        %s200 = ssub.s32 %s16, 1
        %s201 = smul.u32 16, %s21
        %p202 = scmp.lt.s32.totalorder %s201, 31
        %s203 = scalar_select %p202, %s201, 31
        %s204 = smul.addr %s203, 8
        %s205 = scalar_lea.vmem %s0, %s204
        %p206 = pneg %p42
        %p207 = pneg %p39
        %p208 = pneg %p63
        %p209 = pneg %p60
        %p210 = pneg %p84
        %p211 = pneg %p81
        %p212 = pneg %p105
        %p213 = pneg %p102
        %p214 = pneg %p131
        %p215 = pneg %p128
        %s216 = sand.u32 %s118, 1
        %s217 = scalar_lea.sflag [#allocation4], %s216
        %s218 = sand.u32 %s118, 1
        %s219 = smul.addr %s218, 128
        %s220 = scalar_lea.vmem [#allocation3], %s219
        %p221 = pneg %p157
        %p222 = pneg %p154
        %s223 = smul.u32 16, %s21
        %p224 = scmp.lt.s32.totalorder %s223, 31
        %s225 = scalar_select %p224, %s223, 31
        %s226 = smul.addr %s225, 8
        %s227 = scalar_lea.vmem %s5, %s226
        %s228 = smul.u32 16, %s21
        %p229 = scmp.lt.s32.totalorder %s228, 31
        %s230 = scalar_select %p229, %s228, 31
        %s231 = smul.addr %s230, 8
        %s232 = scalar_lea.vmem %s0, %s231
        %s233 = smul.u32 16, %s21
        %s234 = smul.u32 16, %s21
        %s235 = smul.u32 16, %s21
        %p236 = scmp.lt.s32.totalorder %s235, 31
        %s237 = scalar_select %p236, %s235, 31
        %s238 = smul.addr %s237, 8
        %s239 = scalar_lea.vmem %s5, %s238
        %s240 = smul.u32 16, %s21
        %v241 = vld [vmem:[%s232] sm:$0xff]
        %v242 = vld [vmem:[%s232 + $0x8] sm:$0xff]
        %v243 = vld [vmem:[%s232 + $0x10] sm:$0xff]
        %v244 = vld [vmem:[%s232 + $0x18] sm:$0xff]
        %v245 = vld [vmem:[%s232 + $0x20] sm:$0xff]
        %v246 = vld [vmem:[%s232 + $0x28] sm:$0xff]
        %v247 = vld [vmem:[%s232 + $0x30] sm:$0xff]
        %v248 = vld [vmem:[%s232 + $0x38] sm:$0xff]
        %v249 = vld [vmem:[%s232 + $0x40] sm:$0xff]
        %v250 = vld [vmem:[%s232 + $0x48] sm:$0xff]
        %v251 = vld [vmem:[%s232 + $0x50] sm:$0xff]
        %v252 = vld [vmem:[%s232 + $0x58] sm:$0xff]
        %v253 = vld [vmem:[%s232 + $0x60] sm:$0xff]
        %v254 = vld [vmem:[%s232 + $0x68] sm:$0xff]
        %v255 = vld [vmem:[%s232 + $0x70] sm:$0xff]
        %v256 = vld [vmem:[%s232 + $0x78] sm:$0xff]
        %v257 = vld [vmem:[%s1] sm:$0xff]
        %v258 = vld [vmem:[%s1 + $0x8] sm:$0xff]
        %v259 = vld [vmem:[%s1 + $0x10] sm:$0xff]
        %v260 = vld [vmem:[%s1 + $0x18] sm:$0xff]
        %v261 = vld [vmem:[%s1 + $0x20] sm:$0xff]
        %v262 = vld [vmem:[%s1 + $0x28] sm:$0xff]
        %v263 = vld [vmem:[%s1 + $0x30] sm:$0xff]
        %v264 = vld [vmem:[%s1 + $0x38] sm:$0xff]
        %v265 = vld [vmem:[%s1 + $0x40] sm:$0xff]
        %v266 = vld [vmem:[%s1 + $0x48] sm:$0xff]
        %v267 = vld [vmem:[%s1 + $0x50] sm:$0xff]
        %v268 = vld [vmem:[%s1 + $0x58] sm:$0xff]
        %v269 = vld [vmem:[%s1 + $0x60] sm:$0xff]
        %v270 = vld [vmem:[%s1 + $0x68] sm:$0xff]
        %v271 = vld [vmem:[%s1 + $0x70] sm:$0xff]
        %v272 = vld [vmem:[%s1 + $0x78] sm:$0xff]
        %v273 = vld [vmem:[%s1 + $0x80] sm:$0xff]
        %v274 = vld [vmem:[%s1 + $0x88] sm:$0xff]
        %v275 = vld [vmem:[%s1 + $0x90] sm:$0xff]
        %v276 = vld [vmem:[%s1 + $0x98] sm:$0xff]
        %v277 = vld [vmem:[%s1 + $0xa0] sm:$0xff]
        %v278 = vld [vmem:[%s1 + $0xa8] sm:$0xff]
        %v279 = vld [vmem:[%s1 + $0xb0] sm:$0xff]
        %v280 = vld [vmem:[%s1 + $0xb8] sm:$0xff]
        %vm281 = vcmask 523264
        %v283 = vsel %vm281, %v241, 0
        %v286 = vsel %vm281, %v242, 0
        %v289 = vsel %vm281, %v243, 0
        %v292 = vsel %vm281, %v244, 0
        %v295 = vsel %vm281, %v245, 0
        %v298 = vsel %vm281, %v246, 0
        %v301 = vsel %vm281, %v247, 0
        %v304 = vsel %vm281, %v248, 0
        %v307 = vsel %vm281, %v249, 0
        %v310 = vsel %vm281, %v250, 0
        %v313 = vsel %vm281, %v251, 0
        %v316 = vsel %vm281, %v252, 0
        %v319 = vsel %vm281, %v253, 0
        %v322 = vsel %vm281, %v254, 0
        %v325 = vsel %vm281, %v255, 0
        %v328 = vsel %vm281, %v256, 0
        %330 = vmatprep.subr.mxu0 0.0
        %331 = vmatpush1.msra.mxu0 0.0
        %332 = vmatprep.subr.mxu0 0.0
        %333 = vmatpush1.msra.mxu0 0.0
        %334 = vmatprep.subr.mxu0 0.0
        %335 = vmatpush1.msra.mxu0 0.0
        %336 = vmatprep.subr.mxu0 0.0
        %337 = vmatpush1.msra.mxu0 0.0
        %338 = vmatprep.subr.mxu0 0.0
        %339 = vmatpush1.msra.mxu0 0.0
        %340 = vmatprep.subr.mxu0 0.0
        %341 = vmatpush1.msra.mxu0 0.0
        %342 = vmatprep.subr.mxu0 0.0
        %343 = vmatpush1.msra.mxu0 0.0
        %344 = vmatprep.subr.mxu0 0.0
        %345 = vmatpush1.msra.mxu0 0.0
        %346 = vmatprep.subr.mxu0 %v279
        %347 = vmatpush1.msra.mxu0 %v278
        %348 = vmatprep.subr.mxu0 %v276
        %349 = vmatpush1.msra.mxu0 %v275
        %350 = vmatprep.subr.mxu0 %v273
        %351 = vmatpush1.msra.mxu0 %v272
        %352 = vmatprep.subr.mxu0 %v270
        %353 = vmatpush1.msra.mxu0 %v269
        %354 = vmatprep.subr.mxu0 %v267
        %355 = vmatpush1.msra.mxu0 %v266
        %356 = vmatprep.subr.mxu0 %v264
        %357 = vmatpush1.msra.mxu0 %v263
        %358 = vmatprep.subr.mxu0 %v261
        %359 = vmatpush1.msra.mxu0 %v260
        %360 = vmatprep.subr.mxu0 %v258
        %361 = vmatpush1.msra.mxu0 %v257
        %362 = vmatprep.subr.mxu0 0.0
        %363 = vmatpush2.msra.mxu0 0.0
        %364 = vmatprep.subr.mxu0 0.0
        %365 = vmatpush2.msra.mxu0 0.0
        %366 = vmatprep.subr.mxu0 0.0
        %367 = vmatpush2.msra.mxu0 0.0
        %368 = vmatprep.subr.mxu0 0.0
        %369 = vmatpush2.msra.mxu0 0.0
        %370 = vmatprep.subr.mxu0 0.0
        %371 = vmatpush2.msra.mxu0 0.0
        %372 = vmatprep.subr.mxu0 0.0
        %373 = vmatpush2.msra.mxu0 0.0
        %374 = vmatprep.subr.mxu0 0.0
        %375 = vmatpush2.msra.mxu0 0.0
        %376 = vmatprep.subr.mxu0 0.0
        %377 = vmatpush2.msra.mxu0 0.0
        %378 = vmatprep.subr.mxu0 0.0
        %379 = vmatpush2.msra.mxu0 0.0
        %380 = vmatprep.subr.mxu0 0.0
        %381 = vmatpush2.msra.mxu0 0.0
        %382 = vmatprep.subr.mxu0 0.0
        %383 = vmatpush2.msra.mxu0 0.0
        %384 = vmatprep.subr.mxu0 0.0
        %385 = vmatpush2.msra.mxu0 0.0
        %386 = vmatprep.subr.mxu0 0.0
        %387 = vmatpush2.msra.mxu0 0.0
        %388 = vmatprep.subr.mxu0 0.0
        %389 = vmatpush2.msra.mxu0 0.0
        %390 = vmatprep.subr.mxu0 0.0
        %391 = vmatpush2.msra.mxu0 0.0
        %392 = vmatprep.subr.mxu0 0.0
        %393 = vmatpush2.msra.mxu0 0.0
        %394 = vmatprep.mubr.f32.mxu0 0.0
        %395 = vmatmul.mubr.f32.gmra.mxu0 %v283
        %v396 = vpop.f32.mrf.mxu0
        %v397 = vadd.f32 0.0, %v396
        %v398 = vpop.f32.mrf.mxu0
        %v399 = vadd.f32 0.0, %v398
        %400 = vmatprep.mubr.f32.mxu0 0.0
        %401 = vmatmul.mubr.f32.gmra.mxu0 %v286
        %v402 = vpop.f32.mrf.mxu0
        %v403 = vadd.f32 0.0, %v402
        %v404 = vpop.f32.mrf.mxu0
        %v405 = vadd.f32 0.0, %v404
        %406 = vmatprep.mubr.f32.mxu0 0.0
        %407 = vmatmul.mubr.f32.gmra.mxu0 %v289
        %v408 = vpop.f32.mrf.mxu0
        %v409 = vadd.f32 0.0, %v408
        %v410 = vpop.f32.mrf.mxu0
        %v411 = vadd.f32 0.0, %v410
        %412 = vmatprep.mubr.f32.mxu0 0.0
        %413 = vmatmul.mubr.f32.gmra.mxu0 %v292
        %v414 = vpop.f32.mrf.mxu0
        %v415 = vadd.f32 0.0, %v414
        %v416 = vpop.f32.mrf.mxu0
        %v417 = vadd.f32 0.0, %v416
        %418 = vmatprep.mubr.f32.mxu0 0.0
        %419 = vmatmul.mubr.f32.gmra.mxu0 %v295
        %v420 = vpop.f32.mrf.mxu0
        %v421 = vadd.f32 0.0, %v420
        %v422 = vpop.f32.mrf.mxu0
        %v423 = vadd.f32 0.0, %v422
        %424 = vmatprep.mubr.f32.mxu0 0.0
        %425 = vmatmul.mubr.f32.gmra.mxu0 %v298
        %v426 = vpop.f32.mrf.mxu0
        %v427 = vadd.f32 0.0, %v426
        %v428 = vpop.f32.mrf.mxu0
        %v429 = vadd.f32 0.0, %v428
        %430 = vmatprep.mubr.f32.mxu0 0.0
        %431 = vmatmul.mubr.f32.gmra.mxu0 %v301
        %v432 = vpop.f32.mrf.mxu0
        %v433 = vadd.f32 0.0, %v432
        %v434 = vpop.f32.mrf.mxu0
        %v435 = vadd.f32 0.0, %v434
        %436 = vmatprep.mubr.f32.mxu0 0.0
        %437 = vmatmul.mubr.f32.gmra.mxu0 %v304
        %v438 = vpop.f32.mrf.mxu0
        %v439 = vadd.f32 0.0, %v438
        %v440 = vpop.f32.mrf.mxu0
        %v441 = vadd.f32 0.0, %v440
        %442 = vmatprep.mubr.f32.mxu0 0.0
        %443 = vmatmul.mubr.f32.gmra.mxu0 %v307
        %v444 = vpop.f32.mrf.mxu0
        %v445 = vadd.f32 0.0, %v444
        %v446 = vpop.f32.mrf.mxu0
        %v447 = vadd.f32 0.0, %v446
        %448 = vmatprep.mubr.f32.mxu0 0.0
        %449 = vmatmul.mubr.f32.gmra.mxu0 %v310
        %v450 = vpop.f32.mrf.mxu0
        %v451 = vadd.f32 0.0, %v450
        %v452 = vpop.f32.mrf.mxu0
        %v453 = vadd.f32 0.0, %v452
        %454 = vmatprep.mubr.f32.mxu0 0.0
        %455 = vmatmul.mubr.f32.gmra.mxu0 %v313
        %v456 = vpop.f32.mrf.mxu0
        %v457 = vadd.f32 0.0, %v456
        %v458 = vpop.f32.mrf.mxu0
        %v459 = vadd.f32 0.0, %v458
        %460 = vmatprep.mubr.f32.mxu0 0.0
        %461 = vmatmul.mubr.f32.gmra.mxu0 %v316
        %v462 = vpop.f32.mrf.mxu0
        %v463 = vadd.f32 0.0, %v462
        %v464 = vpop.f32.mrf.mxu0
        %v465 = vadd.f32 0.0, %v464
        %466 = vmatprep.mubr.f32.mxu0 0.0
        %467 = vmatmul.mubr.f32.gmra.mxu0 %v319
        %v468 = vpop.f32.mrf.mxu0
        %v469 = vadd.f32 0.0, %v468
        %v470 = vpop.f32.mrf.mxu0
        %v471 = vadd.f32 0.0, %v470
        %472 = vmatprep.mubr.f32.mxu0 0.0
        %473 = vmatmul.mubr.f32.gmra.mxu0 %v322
        %v474 = vpop.f32.mrf.mxu0
        %v475 = vadd.f32 0.0, %v474
        %v476 = vpop.f32.mrf.mxu0
        %v477 = vadd.f32 0.0, %v476
        %478 = vmatprep.mubr.f32.mxu0 0.0
        %479 = vmatmul.mubr.f32.gmra.mxu0 %v325
        %v480 = vpop.f32.mrf.mxu0
        %v481 = vadd.f32 0.0, %v480
        %v482 = vpop.f32.mrf.mxu0
        %v483 = vadd.f32 0.0, %v482
        %484 = vmatprep.mubr.f32.mxu0 0.0
        %485 = vmatmul.mubr.f32.gmra.mxu0 %v328
        %v486 = vpop.f32.mrf.mxu0
        %v487 = vadd.f32 0.0, %v486
        %v488 = vpop.f32.mrf.mxu0
        %v489 = vadd.f32 0.0, %v488
        %490 = vdwg.mxu0
        %491 = vmatprep.subr.mxu0 0.0
        %492 = vmatpush1.msra.mxu0 0.0
        %493 = vmatprep.subr.mxu0 0.0
        %494 = vmatpush1.msra.mxu0 0.0
        %495 = vmatprep.subr.mxu0 0.0
        %496 = vmatpush1.msra.mxu0 0.0
        %497 = vmatprep.subr.mxu0 0.0
        %498 = vmatpush1.msra.mxu0 0.0
        %499 = vmatprep.subr.mxu0 0.0
        %500 = vmatpush1.msra.mxu0 0.0
        %501 = vmatprep.subr.mxu0 0.0
        %502 = vmatpush1.msra.mxu0 0.0
        %503 = vmatprep.subr.mxu0 0.0
        %504 = vmatpush1.msra.mxu0 0.0
        %505 = vmatprep.subr.mxu0 0.0
        %506 = vmatpush1.msra.mxu0 0.0
        %507 = vmatprep.subr.mxu0 0.0
        %508 = vmatpush1.msra.mxu0 %v280
        %509 = vmatprep.subr.mxu0 0.0
        %510 = vmatpush1.msra.mxu0 %v277
        %511 = vmatprep.subr.mxu0 0.0
        %512 = vmatpush1.msra.mxu0 %v274
        %513 = vmatprep.subr.mxu0 0.0
        %514 = vmatpush1.msra.mxu0 %v271
        %515 = vmatprep.subr.mxu0 0.0
        %516 = vmatpush1.msra.mxu0 %v268
        %517 = vmatprep.subr.mxu0 0.0
        %518 = vmatpush1.msra.mxu0 %v265
        %519 = vmatprep.subr.mxu0 0.0
        %520 = vmatpush1.msra.mxu0 %v262
        %521 = vmatprep.subr.mxu0 0.0
        %522 = vmatpush1.msra.mxu0 %v259
        %523 = vmatprep.subr.mxu0 0.0
        %524 = vmatpush2.msra.mxu0 0.0
        %525 = vmatprep.subr.mxu0 0.0
        %526 = vmatpush2.msra.mxu0 0.0
        %527 = vmatprep.subr.mxu0 0.0
        %528 = vmatpush2.msra.mxu0 0.0
        %529 = vmatprep.subr.mxu0 0.0
        %530 = vmatpush2.msra.mxu0 0.0
        %531 = vmatprep.subr.mxu0 0.0
        %532 = vmatpush2.msra.mxu0 0.0
        %533 = vmatprep.subr.mxu0 0.0
        %534 = vmatpush2.msra.mxu0 0.0
        %535 = vmatprep.subr.mxu0 0.0
        %536 = vmatpush2.msra.mxu0 0.0
        %537 = vmatprep.subr.mxu0 0.0
        %538 = vmatpush2.msra.mxu0 0.0
        %539 = vmatprep.subr.mxu0 0.0
        %540 = vmatpush2.msra.mxu0 0.0
        %541 = vmatprep.subr.mxu0 0.0
        %542 = vmatpush2.msra.mxu0 0.0
        %543 = vmatprep.subr.mxu0 0.0
        %544 = vmatpush2.msra.mxu0 0.0
        %545 = vmatprep.subr.mxu0 0.0
        %546 = vmatpush2.msra.mxu0 0.0
        %547 = vmatprep.subr.mxu0 0.0
        %548 = vmatpush2.msra.mxu0 0.0
        %549 = vmatprep.subr.mxu0 0.0
        %550 = vmatpush2.msra.mxu0 0.0
        %551 = vmatprep.subr.mxu0 0.0
        %552 = vmatpush2.msra.mxu0 0.0
        %553 = vmatprep.subr.mxu0 0.0
        %554 = vmatpush2.msra.mxu0 0.0
        %555 = vmatprep.mubr.f32.mxu0 0.0
        %556 = vmatmul.mubr.f32.gmra.mxu0 %v283
        %v557 = vpop.f32.mrf.mxu0
        %v558 = vadd.f32 0.0, %v557
        %v559 = vpop.f32.mrf.mxu0
        %560 = vmatprep.mubr.f32.mxu0 0.0
        %561 = vmatmul.mubr.f32.gmra.mxu0 %v286
        %v562 = vpop.f32.mrf.mxu0
        %v563 = vadd.f32 0.0, %v562
        %v564 = vpop.f32.mrf.mxu0
        %565 = vmatprep.mubr.f32.mxu0 0.0
        %566 = vmatmul.mubr.f32.gmra.mxu0 %v289
        %v567 = vpop.f32.mrf.mxu0
        %v568 = vadd.f32 0.0, %v567
        %v569 = vpop.f32.mrf.mxu0
        %570 = vmatprep.mubr.f32.mxu0 0.0
        %571 = vmatmul.mubr.f32.gmra.mxu0 %v292
        %v572 = vpop.f32.mrf.mxu0
        %v573 = vadd.f32 0.0, %v572
        %v574 = vpop.f32.mrf.mxu0
        %575 = vmatprep.mubr.f32.mxu0 0.0
        %576 = vmatmul.mubr.f32.gmra.mxu0 %v295
        %v577 = vpop.f32.mrf.mxu0
        %v578 = vadd.f32 0.0, %v577
        %v579 = vpop.f32.mrf.mxu0
        %580 = vmatprep.mubr.f32.mxu0 0.0
        %581 = vmatmul.mubr.f32.gmra.mxu0 %v298
        %v582 = vpop.f32.mrf.mxu0
        %v583 = vadd.f32 0.0, %v582
        %v584 = vpop.f32.mrf.mxu0
        %585 = vmatprep.mubr.f32.mxu0 0.0
        %586 = vmatmul.mubr.f32.gmra.mxu0 %v301
        %v587 = vpop.f32.mrf.mxu0
        %v588 = vadd.f32 0.0, %v587
        %v589 = vpop.f32.mrf.mxu0
        %590 = vmatprep.mubr.f32.mxu0 0.0
        %591 = vmatmul.mubr.f32.gmra.mxu0 %v304
        %v592 = vpop.f32.mrf.mxu0
        %v593 = vadd.f32 0.0, %v592
        %v594 = vpop.f32.mrf.mxu0
        %595 = vmatprep.mubr.f32.mxu0 0.0
        %596 = vmatmul.mubr.f32.gmra.mxu0 %v307
        %v597 = vpop.f32.mrf.mxu0
        %v598 = vadd.f32 0.0, %v597
        %v599 = vpop.f32.mrf.mxu0
        %600 = vmatprep.mubr.f32.mxu0 0.0
        %601 = vmatmul.mubr.f32.gmra.mxu0 %v310
        %v602 = vpop.f32.mrf.mxu0
        %v603 = vadd.f32 0.0, %v602
        %v604 = vpop.f32.mrf.mxu0
        %605 = vmatprep.mubr.f32.mxu0 0.0
        %606 = vmatmul.mubr.f32.gmra.mxu0 %v313
        %v607 = vpop.f32.mrf.mxu0
        %v608 = vadd.f32 0.0, %v607
        %v609 = vpop.f32.mrf.mxu0
        %610 = vmatprep.mubr.f32.mxu0 0.0
        %611 = vmatmul.mubr.f32.gmra.mxu0 %v316
        %v612 = vpop.f32.mrf.mxu0
        %v613 = vadd.f32 0.0, %v612
        %v614 = vpop.f32.mrf.mxu0
        %615 = vmatprep.mubr.f32.mxu0 0.0
        %616 = vmatmul.mubr.f32.gmra.mxu0 %v319
        %v617 = vpop.f32.mrf.mxu0
        %v618 = vadd.f32 0.0, %v617
        %v619 = vpop.f32.mrf.mxu0
        %620 = vmatprep.mubr.f32.mxu0 0.0
        %621 = vmatmul.mubr.f32.gmra.mxu0 %v322
        %v622 = vpop.f32.mrf.mxu0
        %v623 = vadd.f32 0.0, %v622
        %v624 = vpop.f32.mrf.mxu0
        %625 = vmatprep.mubr.f32.mxu0 0.0
        %626 = vmatmul.mubr.f32.gmra.mxu0 %v325
        %v627 = vpop.f32.mrf.mxu0
        %v628 = vadd.f32 0.0, %v627
        %v629 = vpop.f32.mrf.mxu0
        %630 = vmatprep.mubr.f32.mxu0 0.0
        %631 = vmatmul.mubr.f32.gmra.mxu0 %v328
        %v632 = vpop.f32.mrf.mxu0
        %v633 = vadd.f32 0.0, %v632
        %v634 = vpop.f32.mrf.mxu0
        %635 = vdwg.mxu0
        %v636 = vmax.f32 %v397, 0.0
        %v637 = vmax.f32 %v399, 0.0
        %v638 = vmax.f32 %v558, 0.0
        %v639 = vmax.f32 %v403, 0.0
        %v640 = vmax.f32 %v405, 0.0
        %v641 = vmax.f32 %v563, 0.0
        %v642 = vmax.f32 %v409, 0.0
        %v643 = vmax.f32 %v411, 0.0
        %v644 = vmax.f32 %v568, 0.0
        %v645 = vmax.f32 %v415, 0.0
        %v646 = vmax.f32 %v417, 0.0
        %v647 = vmax.f32 %v573, 0.0
        %v648 = vmax.f32 %v421, 0.0
        %v649 = vmax.f32 %v423, 0.0
        %v650 = vmax.f32 %v578, 0.0
        %v651 = vmax.f32 %v427, 0.0
        %v652 = vmax.f32 %v429, 0.0
        %v653 = vmax.f32 %v583, 0.0
        %v654 = vmax.f32 %v433, 0.0
        %v655 = vmax.f32 %v435, 0.0
        %v656 = vmax.f32 %v588, 0.0
        %v657 = vmax.f32 %v439, 0.0
        %v658 = vmax.f32 %v441, 0.0
        %v659 = vmax.f32 %v593, 0.0
        %v660 = vmax.f32 %v445, 0.0
        %v661 = vmax.f32 %v447, 0.0
        %v662 = vmax.f32 %v598, 0.0
        %v663 = vmax.f32 %v451, 0.0
        %v664 = vmax.f32 %v453, 0.0
        %v665 = vmax.f32 %v603, 0.0
        %v666 = vmax.f32 %v457, 0.0
        %v667 = vmax.f32 %v459, 0.0
        %v668 = vmax.f32 %v608, 0.0
        %v669 = vmax.f32 %v463, 0.0
        %v670 = vmax.f32 %v465, 0.0
        %v671 = vmax.f32 %v613, 0.0
        %v672 = vmax.f32 %v469, 0.0
        %v673 = vmax.f32 %v471, 0.0
        %v674 = vmax.f32 %v618, 0.0
        %v675 = vmax.f32 %v475, 0.0
        %v676 = vmax.f32 %v477, 0.0
        %v677 = vmax.f32 %v623, 0.0
        %v678 = vmax.f32 %v481, 0.0
        %v679 = vmax.f32 %v483, 0.0
        %v680 = vmax.f32 %v628, 0.0
        %v681 = vmax.f32 %v487, 0.0
        %v682 = vmax.f32 %v489, 0.0
        %v683 = vmax.f32 %v633, 0.0
        %v684 = vmul.f32 %v637, 0.4811
        %v685 = vmul.f32 %v640, 0.4811
        %v686 = vmul.f32 %v643, 0.4811
        %v687 = vmul.f32 %v646, 0.4811
        %v688 = vmul.f32 %v649, 0.4811
        %v689 = vmul.f32 %v652, 0.4811
        %v690 = vmul.f32 %v655, 0.4811
        %v691 = vmul.f32 %v658, 0.4811
        %v692 = vmul.f32 %v661, 0.4811
        %v693 = vmul.f32 %v664, 0.4811
        %v694 = vmul.f32 %v667, 0.4811
        %v695 = vmul.f32 %v670, 0.4811
        %v696 = vmul.f32 %v673, 0.4811
        %v697 = vmul.f32 %v676, 0.4811
        %v698 = vmul.f32 %v679, 0.4811
        %v699 = vmul.f32 %v682, 0.4811
        %v700 = vadd.f32 %v636, %v684
        %v701 = vadd.f32 %v639, %v685
        %v702 = vadd.f32 %v642, %v686
        %v703 = vadd.f32 %v645, %v687
        %v704 = vadd.f32 %v648, %v688
        %v705 = vadd.f32 %v651, %v689
        %v706 = vadd.f32 %v654, %v690
        %v707 = vadd.f32 %v657, %v691
        %v708 = vadd.f32 %v660, %v692
        %v709 = vadd.f32 %v663, %v693
        %v710 = vadd.f32 %v666, %v694
        %v711 = vadd.f32 %v669, %v695
        %v712 = vadd.f32 %v672, %v696
        %v713 = vadd.f32 %v675, %v697
        %v714 = vadd.f32 %v678, %v698
        %v715 = vadd.f32 %v681, %v699
        %v716 = vmul.f32 %v638, 0.5189
        %v717 = vmul.f32 %v641, 0.5189
        %v718 = vmul.f32 %v644, 0.5189
        %v719 = vmul.f32 %v647, 0.5189
        %v720 = vmul.f32 %v650, 0.5189
        %v721 = vmul.f32 %v653, 0.5189
        %v722 = vmul.f32 %v656, 0.5189
        %v723 = vmul.f32 %v659, 0.5189
        %v724 = vmul.f32 %v662, 0.5189
        %v725 = vmul.f32 %v665, 0.5189
        %v726 = vmul.f32 %v668, 0.5189
        %v727 = vmul.f32 %v671, 0.5189
        %v728 = vmul.f32 %v674, 0.5189
        %v729 = vmul.f32 %v677, 0.5189
        %v730 = vmul.f32 %v680, 0.5189
        %v731 = vmul.f32 %v683, 0.5189
        %v732 = vadd.f32 %v700, %v716
        %v733 = vadd.f32 %v701, %v717
        %v734 = vadd.f32 %v702, %v718
        %v735 = vadd.f32 %v703, %v719
        %v736 = vadd.f32 %v704, %v720
        %v737 = vadd.f32 %v705, %v721
        %v738 = vadd.f32 %v706, %v722
        %v739 = vadd.f32 %v707, %v723
        %v740 = vadd.f32 %v708, %v724
        %v741 = vadd.f32 %v709, %v725
        %v742 = vadd.f32 %v710, %v726
        %v743 = vadd.f32 %v711, %v727
        %v744 = vadd.f32 %v712, %v728
        %v745 = vadd.f32 %v713, %v729
        %v746 = vadd.f32 %v714, %v730
        %v747 = vadd.f32 %v715, %v731
        %748 = vst [vmem:[%s220] sm:$0xff] %v732
        %749 = vst [vmem:[%s220 + $0x8] sm:$0xff] %v733
        %750 = vst [vmem:[%s220 + $0x10] sm:$0xff] %v734
        %751 = vst [vmem:[%s220 + $0x18] sm:$0xff] %v735
        %752 = vst [vmem:[%s220 + $0x20] sm:$0xff] %v736
        %753 = vst [vmem:[%s220 + $0x28] sm:$0xff] %v737
        %754 = vst [vmem:[%s220 + $0x30] sm:$0xff] %v738
        %755 = vst [vmem:[%s220 + $0x38] sm:$0xff] %v739
        %756 = vst [vmem:[%s220 + $0x40] sm:$0xff] %v740
        %757 = vst [vmem:[%s220 + $0x48] sm:$0xff] %v741
        %758 = vst [vmem:[%s220 + $0x50] sm:$0xff] %v742
        %759 = vst [vmem:[%s220 + $0x58] sm:$0xff] %v743
        %760 = vst [vmem:[%s220 + $0x60] sm:$0xff] %v744
        %761 = vst [vmem:[%s220 + $0x68] sm:$0xff] %v745
        %762 = vst [vmem:[%s220 + $0x70] sm:$0xff] %v746
        %763 = vst [vmem:[%s220 + $0x78] sm:$0xff] %v747
        %v764 = vld [vmem:[%s2] sm:$0x1]
        %v766 = vlaneseq
        %v767 = vshrl.u32 %v766, 7
        %v768 = vsub.s32 0, %v767
        %v769 = vrot.slane %v764, %v768
        %v771 = vmul.f32 %v732, %v769
        %v772 = vmul.f32 %v733, %v769
        %v773 = vmul.f32 %v734, %v769
        %v774 = vmul.f32 %v735, %v769
        %v775 = vmul.f32 %v736, %v769
        %v776 = vmul.f32 %v737, %v769
        %v777 = vmul.f32 %v738, %v769
        %v778 = vmul.f32 %v739, %v769
        %v779 = vmul.f32 %v740, %v769
        %v780 = vmul.f32 %v741, %v769
        %v781 = vmul.f32 %v742, %v769
        %v782 = vmul.f32 %v743, %v769
        %v783 = vmul.f32 %v744, %v769
        %v784 = vmul.f32 %v745, %v769
        %v785 = vmul.f32 %v746, %v769
        %v786 = vmul.f32 %v747, %v769
        %787 = vadd.xlane.f32.xlu0 %v771
        %v788 = vpop.xlane.xlu0 %787
        %789 = vadd.xlane.f32.xlu0 %v772
        %v790 = vpop.xlane.xlu0 %789
        %791 = vadd.xlane.f32.xlu0 %v773
        %v792 = vpop.xlane.xlu0 %791
        %793 = vadd.xlane.f32.xlu0 %v774
        %v794 = vpop.xlane.xlu0 %793
        %795 = vadd.xlane.f32.xlu0 %v775
        %v796 = vpop.xlane.xlu0 %795
        %797 = vadd.xlane.f32.xlu0 %v776
        %v798 = vpop.xlane.xlu0 %797
        %799 = vadd.xlane.f32.xlu0 %v777
        %v800 = vpop.xlane.xlu0 %799
        %801 = vadd.xlane.f32.xlu0 %v778
        %v802 = vpop.xlane.xlu0 %801
        %803 = vadd.xlane.f32.xlu0 %v779
        %v804 = vpop.xlane.xlu0 %803
        %805 = vadd.xlane.f32.xlu0 %v780
        %v806 = vpop.xlane.xlu0 %805
        %807 = vadd.xlane.f32.xlu0 %v781
        %v808 = vpop.xlane.xlu0 %807
        %809 = vadd.xlane.f32.xlu0 %v782
        %v810 = vpop.xlane.xlu0 %809
        %811 = vadd.xlane.f32.xlu0 %v783
        %v812 = vpop.xlane.xlu0 %811
        %813 = vadd.xlane.f32.xlu0 %v784
        %v814 = vpop.xlane.xlu0 %813
        %815 = vadd.xlane.f32.xlu0 %v785
        %v816 = vpop.xlane.xlu0 %815
        %817 = vadd.xlane.f32.xlu0 %v786
        %v818 = vpop.xlane.xlu0 %817
        %s819 = sld [smem:[#allocation2]]
        %v820 = vstv %s819
        %v821 = vadd.f32 %v788, %v820
        %v822 = vadd.f32 %v790, %v820
        %v823 = vadd.f32 %v792, %v820
        %v824 = vadd.f32 %v794, %v820
        %v825 = vadd.f32 %v796, %v820
        %v826 = vadd.f32 %v798, %v820
        %v827 = vadd.f32 %v800, %v820
        %v828 = vadd.f32 %v802, %v820
        %v829 = vadd.f32 %v804, %v820
        %v830 = vadd.f32 %v806, %v820
        %v831 = vadd.f32 %v808, %v820
        %v832 = vadd.f32 %v810, %v820
        %v833 = vadd.f32 %v812, %v820
        %v834 = vadd.f32 %v814, %v820
        %v835 = vadd.f32 %v816, %v820
        %v836 = vadd.f32 %v818, %v820
        %v837 = vxor.u32 %v821, 2147483648
        %v838 = vxor.u32 %v822, 2147483648
        %v839 = vxor.u32 %v823, 2147483648
        %v840 = vxor.u32 %v824, 2147483648
        %v841 = vxor.u32 %v825, 2147483648
        %v842 = vxor.u32 %v826, 2147483648
        %v843 = vxor.u32 %v827, 2147483648
        %v844 = vxor.u32 %v828, 2147483648
        %v845 = vxor.u32 %v829, 2147483648
        %v846 = vxor.u32 %v830, 2147483648
        %v847 = vxor.u32 %v831, 2147483648
        %v848 = vxor.u32 %v832, 2147483648
        %v849 = vxor.u32 %v833, 2147483648
        %v850 = vxor.u32 %v834, 2147483648
        %v851 = vxor.u32 %v835, 2147483648
        %v852 = vxor.u32 %v836, 2147483648
        %v853 = vmul.f32 %v837, 1.442695
        %v854 = vpow.pop %v853
        %v855 = vmul.f32 %v838, 1.442695
        %v856 = vpow.pop %v855
        %v857 = vmul.f32 %v839, 1.442695
        %v858 = vpow.pop %v857
        %v859 = vmul.f32 %v840, 1.442695
        %v860 = vpow.pop %v859
        %v861 = vmul.f32 %v841, 1.442695
        %v862 = vpow.pop %v861
        %v863 = vmul.f32 %v842, 1.442695
        %v864 = vpow.pop %v863
        %v865 = vmul.f32 %v843, 1.442695
        %v866 = vpow.pop %v865
        %v867 = vmul.f32 %v844, 1.442695
        %v868 = vpow.pop %v867
        %v869 = vmul.f32 %v845, 1.442695
        %v870 = vpow.pop %v869
        %v871 = vmul.f32 %v846, 1.442695
        %v872 = vpow.pop %v871
        %v873 = vmul.f32 %v847, 1.442695
        %v874 = vpow.pop %v873
        %v875 = vmul.f32 %v848, 1.442695
        %v876 = vpow.pop %v875
        %v877 = vmul.f32 %v849, 1.442695
        %v878 = vpow.pop %v877
        %v879 = vmul.f32 %v850, 1.442695
        %v880 = vpow.pop %v879
        %v881 = vmul.f32 %v851, 1.442695
        %v882 = vpow.pop %v881
        %v883 = vmul.f32 %v852, 1.442695
        %v884 = vpow.pop %v883
        %v885 = vadd.f32 %v854, 1.0
        %v886 = vadd.f32 %v856, 1.0
        %v887 = vadd.f32 %v858, 1.0
        %v888 = vadd.f32 %v860, 1.0
        %v889 = vadd.f32 %v862, 1.0
        %v890 = vadd.f32 %v864, 1.0
        %v891 = vadd.f32 %v866, 1.0
        %v892 = vadd.f32 %v868, 1.0
        %v893 = vadd.f32 %v870, 1.0
        %v894 = vadd.f32 %v872, 1.0
        %v895 = vadd.f32 %v874, 1.0
        %v896 = vadd.f32 %v876, 1.0
        %v897 = vadd.f32 %v878, 1.0
        %v898 = vadd.f32 %v880, 1.0
        %v899 = vadd.f32 %v882, 1.0
        %v900 = vadd.f32 %v884, 1.0
        %v901 = vrcp.pop %v885
        %v902 = vmul.f32 1.0, %v901
        %v903 = vrcp.pop %v886
        %v904 = vmul.f32 1.0, %v903
        %v905 = vrcp.pop %v887
        %v906 = vmul.f32 1.0, %v905
        %v907 = vrcp.pop %v888
        %v908 = vmul.f32 1.0, %v907
        %v909 = vrcp.pop %v889
        %v910 = vmul.f32 1.0, %v909
        %v911 = vrcp.pop %v890
        %v912 = vmul.f32 1.0, %v911
        %v913 = vrcp.pop %v891
        %v914 = vmul.f32 1.0, %v913
        %v915 = vrcp.pop %v892
        %v916 = vmul.f32 1.0, %v915
        %v917 = vrcp.pop %v893
        %v918 = vmul.f32 1.0, %v917
        %v919 = vrcp.pop %v894
        %v920 = vmul.f32 1.0, %v919
        %v921 = vrcp.pop %v895
        %v922 = vmul.f32 1.0, %v921
        %v923 = vrcp.pop %v896
        %v924 = vmul.f32 1.0, %v923
        %v925 = vrcp.pop %v897
        %v926 = vmul.f32 1.0, %v925
        %v927 = vrcp.pop %v898
        %v928 = vmul.f32 1.0, %v927
        %v929 = vrcp.pop %v899
        %v930 = vmul.f32 1.0, %v929
        %v931 = vrcp.pop %v900
        %v932 = vmul.f32 1.0, %v931
        %vm933 = vcmask 7168
        %934 = vst.msk [vmem:[%s239] sm:$0xff] %vm933, %v902
        %935 = vst.msk [vmem:[%s239 + $0x8] sm:$0xff] %vm933, %v904
        %936 = vst.msk [vmem:[%s239 + $0x10] sm:$0xff] %vm933, %v906
        %937 = vst.msk [vmem:[%s239 + $0x18] sm:$0xff] %vm933, %v908
        %938 = vst.msk [vmem:[%s239 + $0x20] sm:$0xff] %vm933, %v910
        %939 = vst.msk [vmem:[%s239 + $0x28] sm:$0xff] %vm933, %v912
        %940 = vst.msk [vmem:[%s239 + $0x30] sm:$0xff] %vm933, %v914
        %941 = vst.msk [vmem:[%s239 + $0x38] sm:$0xff] %vm933, %v916
        %942 = vst.msk [vmem:[%s239 + $0x40] sm:$0xff] %vm933, %v918
        %943 = vst.msk [vmem:[%s239 + $0x48] sm:$0xff] %vm933, %v920
        %944 = vst.msk [vmem:[%s239 + $0x50] sm:$0xff] %vm933, %v922
        %945 = vst.msk [vmem:[%s239 + $0x58] sm:$0xff] %vm933, %v924
        %946 = vst.msk [vmem:[%s239 + $0x60] sm:$0xff] %vm933, %v926
        %947 = vst.msk [vmem:[%s239 + $0x68] sm:$0xff] %vm933, %v928
        %948 = vst.msk [vmem:[%s239 + $0x70] sm:$0xff] %vm933, %v930
        %949 = vst.msk [vmem:[%s239 + $0x78] sm:$0xff] %vm933, %v932
        %s950 = sand.u32 %s118, 1
        %s951 = scalar_lea.sflag [#allocation4], %s950
        %s952 = sand.u32 %s118, 1
        %s953 = smul.addr %s952, 128
        %s954 = scalar_lea.vmem [#allocation3], %s953
        %s955 = smul.u32 16, %s21
        %p956 = scmp.lt.s32.totalorder %s955, 31
        %s957 = scalar_select %p956, %s955, 31
        %s958 = smul.addr %s957, 8
        %s959 = scalar_lea.vmem %s5, %s958
        // Predicated region
        $region37: #{tpu_custom_call.1} parent=35 // pred_check
          %p960 = pneg %p128
        $region38: #{tpu_custom_call.1} parent=35 // pred_check_branch
          %962 = sbr.rel (%p960) target = $region40
        $region39: #{tpu_custom_call.1} parent=35 // pred_region
          %s963 = smul.u32 16, %s21
          %s965 = ssub.s32 2048, 2048
          %966 = vsyncadd %s951, %s965
          %s967 = smul.addr %s963, 128
          %s968 = scalar_lea.hbm %s4, %s967
          %s969 = sshll.u32 %s954, 4
          %s970 = int_to_ptr.vmem [resolvable:$true] %s969
          %975 = dma.vmem_to_hbm [thread:$0]  %s970, 2048, %s968, %s951, 128, 128, 8
        $region40: #{tpu_custom_call.1} parent=35 // pred_fallthru
          _
        // Predicated region
        $region41: #{tpu_custom_call.1} parent=35 // pred_check
          %p976 = pneg %p154
        $region42: #{tpu_custom_call.1} parent=35 // pred_check_branch
          %978 = sbr.rel (%p976) target = $region44
        $region43: #{tpu_custom_call.1} parent=35 // pred_region
          %s979 = smul.u32 16, %s21
        $region44: #{tpu_custom_call.1} parent=35 // pred_fallthru
          _
      $region36: #{tpu_custom_call.1} parent=5 // pred_fallthru
        _
      %p980 = scmp.le.s32.totalorder 2, %s16
      // Predicated region
      $region45: #{tpu_custom_call.1} parent=5 // pred_check
        %p981 = pneg %p980
      $region46: #{tpu_custom_call.1} parent=5 // pred_check_branch
        %983 = sbr.rel (%p981) target = $region48
      $region47: #{tpu_custom_call.1} parent=5 // pred_region
        %s984 = ssub.s32 %s16, 2
        // Predicated region
        $region49: #{tpu_custom_call.1} parent=47 // pred_check
          %p985 = pneg %p134
        $region50: #{tpu_custom_call.1} parent=47 // pred_check_branch
          %987 = sbr.rel (%p985) target = $region52
        $region51: #{tpu_custom_call.1} parent=47 // pred_region
          %s988 = sand.u32 %s119, 1
          %s989 = scalar_lea.sflag [#allocation4], %s988
          %s990 = sand.u32 %s119, 1
          %s991 = smul.addr %s990, 128
          %s992 = scalar_lea.vmem [#allocation3], %s991
          %993 = dma.done %s989, 2048
        $region52: #{tpu_custom_call.1} parent=47 // pred_fallthru
          _
        // Predicated region
        $region53: #{tpu_custom_call.1} parent=47 // pred_check
          %p994 = pneg %p160
        $region54: #{tpu_custom_call.1} parent=47 // pred_check_branch
          %996 = sbr.rel (%p994) target = $region56
        $region55: #{tpu_custom_call.1} parent=47 // pred_region
          %s997 = smul.u32 16, %s22
          %p998 = scmp.lt.s32.totalorder %s997, 31
          %s999 = scalar_select %p998, %s997, 31
          %s1000 = smul.addr %s999, 8
          %s1001 = scalar_lea.vmem %s5, %s1000
        $region56: #{tpu_custom_call.1} parent=47 // pred_fallthru
          _
      $region48: #{tpu_custom_call.1} parent=5 // pred_fallthru
        _
    $region6: #{tpu_custom_call.1} parent=1 // loop_footer
      %s20 = sadd.s32 1, %s16
    $region7: #{tpu_custom_call.1} parent=1 // loop_footer_branch
      %15 = sbr.rel target = $region3
    $region8: #{tpu_custom_call.1} parent=1 // loop_exit
      _
    %1002 = vsyncpa [#allocation4], 1
    %s1003 = scalar_lea.sflag [#allocation4], 1
    %1004 = vsyncpa %s1003, 1

</llo_original>
